<compile_context>
chip_gen: v5e
topology: v5e:2x2
jax: 0.10.0
libtpu: 0.0.40
codegen_flags: <defaults>
</compile_context>

<pallas_src>
import functools

import jax
import jax.numpy as jnp
from jax import lax
from jax.experimental import pallas as pl
from jax.experimental.pallas import tpu as pltpu


def _round_up(v, m):
    return (v + m - 1) // m * m


def _cdiv(a, b):
    return -(-a // b)


def _vicreg_kernel(x_ref, y_ref, out_ref,
                   gram_x_ref, gram_y_ref,
                   sum_x_ref, sum_y_ref, sse_ref,
                   *, n, d, d_true, dim_size, sim_coeff, std_coeff, cov_coeff,
                   mxu_dtype):
    b = pl.program_id(0)

    @pl.when(b == 0)
    def _init():
        gram_x_ref[...] = jnp.zeros_like(gram_x_ref)
        gram_y_ref[...] = jnp.zeros_like(gram_y_ref)
        sum_x_ref[...] = jnp.zeros_like(sum_x_ref)
        sum_y_ref[...] = jnp.zeros_like(sum_y_ref)
        sse_ref[...] = jnp.zeros_like(sse_ref)

    x = x_ref[...]                       # (TB, Dp), input dtype
    y = y_ref[...]
    xf = x.astype(jnp.float32)
    yf = y.astype(jnp.float32)

    # Fused elementwise pass: per-feature (axis-0 only) accumulations.
    diff = xf - yf
    sse_ref[...] += jnp.sum(diff * diff, axis=0, keepdims=True)
    sum_x_ref[...] += jnp.sum(xf, axis=0, keepdims=True)
    sum_y_ref[...] += jnp.sum(yf, axis=0, keepdims=True)

    # Raw Gram matrices: contract the batch axis directly (no transpose).
    xg = x if mxu_dtype is None else x.astype(mxu_dtype)
    yg = y if mxu_dtype is None else y.astype(mxu_dtype)
    dn_batch = (((0,), (0,)), ((), ()))
    gram_x_ref[...] += lax.dot_general(xg, xg, dn_batch,
                                       preferred_element_type=jnp.float32)
    gram_y_ref[...] += lax.dot_general(yg, yg, dn_batch,
                                       preferred_element_type=jnp.float32)

    @pl.when(b == pl.num_programs(0) - 1)
    def _finalize():
        dp = gram_x_ref.shape[0]
        inv_n = 1.0 / n
        inv_nm1 = 1.0 / (n - 1.0)

        mean_x = sum_x_ref[...] * inv_n          # (1, Dp)
        mean_y = sum_y_ref[...] * inv_n

        gx = gram_x_ref[...]
        gy = gram_y_ref[...]

        # diag(G)[i] == sum_b x[b, i]^2 -- one masked reduce, amortized.
        rows = lax.broadcasted_iota(jnp.int32, (dp, dp), 0)
        cols = lax.broadcasted_iota(jnp.int32, (dp, dp), 1)
        eye = rows == cols
        diag_gx = jnp.sum(jnp.where(eye, gx, 0.0), axis=0, keepdims=True)
        diag_gy = jnp.sum(jnp.where(eye, gy, 0.0), axis=0, keepdims=True)

        # Per-feature centered sum-of-squares (diag of the centered Gram).
        diag_x = diag_gx - n * mean_x * mean_x
        diag_y = diag_gy - n * mean_y * mean_y

        # std (hinge) loss; torch.var is unbiased -> /(n-1). Padded feature
        # columns (>= d_true) are masked out of the hinge sum.
        feat = lax.broadcasted_iota(jnp.int32, (1, dp), 1)
        valid = feat < d_true
        std_x = jnp.sqrt(diag_x * inv_nm1 + 1e-4)
        std_y = jnp.sqrt(diag_y * inv_nm1 + 1e-4)
        hinge = (jnp.sum(jnp.where(valid, jnp.maximum(1.0 - std_x, 0.0), 0.0)) +
                 jnp.sum(jnp.where(valid, jnp.maximum(1.0 - std_y, 0.0), 0.0)))
        std_loss = hinge / (2.0 * d)

        # Covariance loss without building the centered Gram:
        #   ||G - n*mu*mu^T||_F^2 = sum(G*G) - 2n*(mu^T G mu) + n^2*(mu^T mu)^2
        # off-diag^2 sum = Frobenius^2 - sum(diag(CG)^2).
        dn_vec = (((1,), (0,)), ((), ()))
        gmx = lax.dot_general(mean_x, gx, dn_vec,
                              preferred_element_type=jnp.float32)   # (1, Dp)
        gmy = lax.dot_general(mean_y, gy, dn_vec,
                              preferred_element_type=jnp.float32)
        mu_g_mu_x = jnp.sum(gmx * mean_x)
        mu_g_mu_y = jnp.sum(gmy * mean_y)
        mu2_x = jnp.sum(mean_x * mean_x)
        mu2_y = jnp.sum(mean_y * mean_y)

        fro_gx = jnp.sum(gx * gx)
        fro_gy = jnp.sum(gy * gy)
        fro_cgx = fro_gx - 2.0 * n * mu_g_mu_x + n * n * mu2_x * mu2_x
        fro_cgy = fro_gy - 2.0 * n * mu_g_mu_y + n * n * mu2_y * mu2_y

        off_x = fro_cgx - jnp.sum(diag_x * diag_x)
        off_y = fro_cgy - jnp.sum(diag_y * diag_y)
        cov_loss = (off_x + off_y) * (inv_nm1 * inv_nm1) / dim_size

        # repr_loss = F.mse_loss(x, y) (mean over the true n*d elements;
        # padded rows/columns contribute zero to the SSE vector).
        repr_loss = jnp.sum(sse_ref[...]) / (n * d)

        out_ref[0, 0] = (sim_coeff * repr_loss + std_coeff * std_loss +
                         cov_coeff * cov_loss)


def vicreg_loss(image_features, text_features, *, dim_size,
                sim_coeff=25.0, std_coeff=25.0, cov_coeff=1.0,
                mxu_dtype=None):
    x = image_features
    y = text_features
    n, d = x.shape
    assert y.shape == (n, d)
    assert n >= 2, "VICReg uses unbiased variance; batch must be >= 2"

    # --- lane-dense feature layout: pad D to a multiple of 128. -------------
    d_pad = _round_up(d, 128)
    if d_pad != d:
        pad_d = ((0, 0), (0, d_pad - d))
        x = jnp.pad(x, pad_d)
        y = jnp.pad(y, pad_d)

    # --- generation-aware VMEM capacity (64 MiB fallback ~= v7x per-TC). ----
    try:
        vmem_cap = int(pltpu.get_tpu_info().vmem_capacity_bytes)
    except Exception:  # older jax / CPU tracing fallback
        vmem_cap = 64 << 20

    # --- batch tile: byte-sized (>=512 rows), minimal zero-padding of n. ----
    tile_target_bytes = (4 << 20) if vmem_cap >= (96 << 20) else (2 << 20)
    target_rows = max(512, tile_target_bytes // (4 * d_pad))
    target_rows = _round_up(target_rows, 8)
    block_rows = min(target_rows, _round_up(n, 8))
    n_steps = max(1, _cdiv(n, block_rows))
    tb = _round_up(_cdiv(n, n_steps), 8)     # balances steps, minimizes padding
    n_pad = tb * n_steps
    if n_pad != n:
        # Zero rows contribute nothing to any accumulator; every
        # normalization inside the kernel uses the true n.
        pad_n = ((0, n_pad - n), (0, 0))
        x = jnp.pad(x, pad_n)
        y = jnp.pad(y, pad_n)
    grid = (n_steps,)

    # --- VMEM budget: tiles (double-buffered) + accumulators + finalize. ----
    itemsize = 4
    tile_bytes = tb * d_pad * itemsize
    gram_bytes = d_pad * d_pad * itemsize
    vec_bytes = 8 * d_pad * itemsize
    need = (2 * 2 * tile_bytes      # x, y double-buffered tiles
            + 2 * gram_bytes        # Gram accumulators (single-buffered scratch)
            + 3 * vec_bytes         # sum_x, sum_y, sse vectors
            + 2 * gram_bytes)       # transient finalize buffers (masked diag, G*G)
    vmem_limit = int(min(max(need + (8 << 20), 32 << 20),
                         vmem_cap - (8 << 20)))   # always leave compiler headroom

    kernel = functools.partial(
        _vicreg_kernel,
        n=float(n),
        d=float(d),
        d_true=int(d),
        dim_size=float(dim_size),
        sim_coeff=float(sim_coeff),
        std_coeff=float(std_coeff),
        cov_coeff=float(cov_coeff),
        mxu_dtype=mxu_dtype,
    )

    out = pl.pallas_call(
        kernel,
        out_shape=jax.ShapeDtypeStruct((1, 1), jnp.float32),
        grid_spec=pltpu.PrefetchScalarGridSpec(
            num_scalar_prefetch=0,
            grid=grid,
            in_specs=[
                pl.BlockSpec((tb, d_pad), lambda b: (b, 0)),
                pl.BlockSpec((tb, d_pad), lambda b: (b, 0)),
            ],
            out_specs=pl.BlockSpec(memory_space=pltpu.SMEM),
            scratch_shapes=[
                pltpu.VMEM((d_pad, d_pad), jnp.float32),   # gram_x
                pltpu.VMEM((d_pad, d_pad), jnp.float32),   # gram_y
                pltpu.VMEM((1, d_pad), jnp.float32),       # sum_x
                pltpu.VMEM((1, d_pad), jnp.float32),       # sum_y
                pltpu.VMEM((1, d_pad), jnp.float32),       # sum((x-y)^2) per feature
            ]),
        compiler_params=pltpu.CompilerParams(
            dimension_semantics=("arbitrary",),
            vmem_limit_bytes=vmem_limit),
    )(x, y)
    return out[0, 0]


def _vicreg_loss_ref(x, y, dim_size, sim_coeff=25.0, std_coeff=25.0,
                     cov_coeff=1.0):
    # Pure-JAX reference mirroring the PyTorch forward (two-pass centering).
    n = x.shape[0]
    repr_loss = jnp.mean((x - y) ** 2)
    xc = x - jnp.mean(x, axis=0)
    yc = y - jnp.mean(y, axis=0)
    std_x = jnp.sqrt(jnp.var(x, axis=0, ddof=1) + 1e-4)
    std_y = jnp.sqrt(jnp.var(y, axis=0, ddof=1) + 1e-4)
    std_loss = (jnp.mean(jax.nn.relu(1 - std_x)) / 2 +
                jnp.mean(jax.nn.relu(1 - std_y)) / 2)
    cov_x = xc.T @ xc / (n - 1)
    cov_y = yc.T @ yc / (n - 1)
    dd = cov_x.shape[0]
    mask = ~jnp.eye(dd, dtype=bool)
    cov_loss = (jnp.sum(jnp.where(mask, cov_x, 0.0) ** 2) / dim_size +
                jnp.sum(jnp.where(mask, cov_y, 0.0) ** 2) / dim_size)
    return sim_coeff * repr_loss + std_coeff * std_loss + cov_coeff * cov_loss


if __name__ == "__main__":
    # Small synthetic shapes: batch=8 feature pairs of dim=32.
    batch, dim = 8, 32
    key = jax.random.PRNGKey(0)
    k1, k2 = jax.random.split(key)
    image_features = jax.random.normal(k1, (batch, dim), dtype=jnp.float32)
    text_features = jax.random.normal(k2, (batch, dim), dtype=jnp.float32)

    loss = vicreg_loss(image_features, text_features, dim_size=dim)
    loss = jax.block_until_ready(loss)

    ref = _vicreg_loss_ref(image_features, text_features, dim_size=dim)
    assert jnp.allclose(loss, ref, rtol=1e-4, atol=1e-5), (loss, ref)

    print("KERNEL_OK")
</pallas_src>

<mosaic_0001>
module attributes {stable_mosaic.version = 11 : i64} {
  func.func @_vicreg_kernel(%arg0: i32, %arg1: memref<8x128xf32, #tpu.memory_space<vmem>>, %arg2: memref<8x128xf32, #tpu.memory_space<vmem>>, %arg3: memref<1x1xf32, #tpu.memory_space<smem>>, %arg4: memref<128x128xf32, #tpu.memory_space<vmem>>, %arg5: memref<128x128xf32, #tpu.memory_space<vmem>>, %arg6: memref<1x128xf32, #tpu.memory_space<vmem>>, %arg7: memref<1x128xf32, #tpu.memory_space<vmem>>, %arg8: memref<1x128xf32, #tpu.memory_space<vmem>>) attributes {dimension_semantics = [#tpu.dimension_semantics<arbitrary>], iteration_bounds = array<i64: 1>, scalar_prefetch = 0 : i64, scratch_operands = 5 : i64, tpu.core_type = #tpu.core_type<tc>, window_params = [{transform_indices = @transform_0, window_bounds = array<i64: 8, 128>}, {transform_indices = @transform_1, window_bounds = array<i64: 8, 128>}, {transform_indices = @transform_2, window_bounds = array<i64: 1, 1>}]} {
    %c0_i32 = arith.constant 0 : i32
    %0 = arith.cmpi eq, %arg0, %c0_i32 : i32
    %1 = arith.extui %0 : i1 to i32
    %c0_i32_0 = arith.constant 0 : i32
    %2 = arith.cmpi ne, %1, %c0_i32_0 : i32
    scf.if %2 {
      %cst_30 = arith.constant 0.000000e+00 : f32
      %33 = vector.broadcast %cst_30 : f32 to vector<128x128xf32>
      %c0_31 = arith.constant 0 : index
      %c0_32 = arith.constant 0 : index
      %34 = vector.load %arg4[%c0_31, %c0_32] : memref<128x128xf32, #tpu.memory_space<vmem>>, vector<128x128xf32>
      tpu.vector_store %arg4[%c0_31, %c0_32], %33 {strides = array<i32>} : memref<128x128xf32, #tpu.memory_space<vmem>>, vector<128x128xf32>,
      %cst_33 = arith.constant 0.000000e+00 : f32
      %35 = vector.broadcast %cst_33 : f32 to vector<128x128xf32>
      %c0_34 = arith.constant 0 : index
      %c0_35 = arith.constant 0 : index
      %36 = vector.load %arg5[%c0_34, %c0_35] : memref<128x128xf32, #tpu.memory_space<vmem>>, vector<128x128xf32>
      tpu.vector_store %arg5[%c0_34, %c0_35], %35 {strides = array<i32>} : memref<128x128xf32, #tpu.memory_space<vmem>>, vector<128x128xf32>,
      %cst_36 = arith.constant 0.000000e+00 : f32
      %37 = vector.broadcast %cst_36 : f32 to vector<1x128xf32>
      %c0_37 = arith.constant 0 : index
      %c0_38 = arith.constant 0 : index
      %38 = vector.load %arg6[%c0_37, %c0_38] : memref<1x128xf32, #tpu.memory_space<vmem>>, vector<1x128xf32>
      tpu.vector_store %arg6[%c0_37, %c0_38], %37 {strides = array<i32>} : memref<1x128xf32, #tpu.memory_space<vmem>>, vector<1x128xf32>,
      %cst_39 = arith.constant 0.000000e+00 : f32
      %39 = vector.broadcast %cst_39 : f32 to vector<1x128xf32>
      %c0_40 = arith.constant 0 : index
      %c0_41 = arith.constant 0 : index
      %40 = vector.load %arg7[%c0_40, %c0_41] : memref<1x128xf32, #tpu.memory_space<vmem>>, vector<1x128xf32>
      tpu.vector_store %arg7[%c0_40, %c0_41], %39 {strides = array<i32>} : memref<1x128xf32, #tpu.memory_space<vmem>>, vector<1x128xf32>,
      %cst_42 = arith.constant 0.000000e+00 : f32
      %41 = vector.broadcast %cst_42 : f32 to vector<1x128xf32>
      %c0_43 = arith.constant 0 : index
      %c0_44 = arith.constant 0 : index
      %42 = vector.load %arg8[%c0_43, %c0_44] : memref<1x128xf32, #tpu.memory_space<vmem>>, vector<1x128xf32>
      tpu.vector_store %arg8[%c0_43, %c0_44], %41 {strides = array<i32>} : memref<1x128xf32, #tpu.memory_space<vmem>>, vector<1x128xf32>,
    } else {
    }
    %c0 = arith.constant 0 : index
    %c0_1 = arith.constant 0 : index
    %3 = vector.load %arg1[%c0, %c0_1] : memref<8x128xf32, #tpu.memory_space<vmem>>, vector<8x128xf32>
    %c0_2 = arith.constant 0 : index
    %c0_3 = arith.constant 0 : index
    %4 = vector.load %arg2[%c0_2, %c0_3] : memref<8x128xf32, #tpu.memory_space<vmem>>, vector<8x128xf32>
    %5 = arith.subf %3, %4 : vector<8x128xf32>
    %c0_4 = arith.constant 0 : index
    %c0_5 = arith.constant 0 : index
    %6 = vector.load %arg8[%c0_4, %c0_5] : memref<1x128xf32, #tpu.memory_space<vmem>>, vector<1x128xf32>
    %7 = arith.mulf %5, %5 : vector<8x128xf32>
    %cst = arith.constant dense<0.000000e+00> : vector<128xf32>
    %8 = vector.multi_reduction <add>, %7, %cst [0] : vector<8x128xf32> to vector<128xf32>
    %9 = vector.shape_cast %8 : vector<128xf32> to vector<1x128xf32>
    %10 = arith.addf %6, %9 : vector<1x128xf32>
    %c0_6 = arith.constant 0 : index
    %c0_7 = arith.constant 0 : index
    %11 = vector.load %arg8[%c0_6, %c0_7] : memref<1x128xf32, #tpu.memory_space<vmem>>, vector<1x128xf32>
    tpu.vector_store %arg8[%c0_6, %c0_7], %10 {strides = array<i32>} : memref<1x128xf32, #tpu.memory_space<vmem>>, vector<1x128xf32>,
    %c0_8 = arith.constant 0 : index
    %c0_9 = arith.constant 0 : index
    %12 = vector.load %arg6[%c0_8, %c0_9] : memref<1x128xf32, #tpu.memory_space<vmem>>, vector<1x128xf32>
    %cst_10 = arith.constant dense<0.000000e+00> : vector<128xf32>
    %13 = vector.multi_reduction <add>, %3, %cst_10 [0] : vector<8x128xf32> to vector<128xf32>
    %14 = vector.shape_cast %13 : vector<128xf32> to vector<1x128xf32>
    %15 = arith.addf %12, %14 : vector<1x128xf32>
    %c0_11 = arith.constant 0 : index
    %c0_12 = arith.constant 0 : index
    %16 = vector.load %arg6[%c0_11, %c0_12] : memref<1x128xf32, #tpu.memory_space<vmem>>, vector<1x128xf32>
    tpu.vector_store %arg6[%c0_11, %c0_12], %15 {strides = array<i32>} : memref<1x128xf32, #tpu.memory_space<vmem>>, vector<1x128xf32>,
    %c0_13 = arith.constant 0 : index
    %c0_14 = arith.constant 0 : index
    %17 = vector.load %arg7[%c0_13, %c0_14] : memref<1x128xf32, #tpu.memory_space<vmem>>, vector<1x128xf32>
    %cst_15 = arith.constant dense<0.000000e+00> : vector<128xf32>
    %18 = vector.multi_reduction <add>, %4, %cst_15 [0] : vector<8x128xf32> to vector<128xf32>
    %19 = vector.shape_cast %18 : vector<128xf32> to vector<1x128xf32>
    %20 = arith.addf %17, %19 : vector<1x128xf32>
    %c0_16 = arith.constant 0 : index
    %c0_17 = arith.constant 0 : index
    %21 = vector.load %arg7[%c0_16, %c0_17] : memref<1x128xf32, #tpu.memory_space<vmem>>, vector<1x128xf32>
    tpu.vector_store %arg7[%c0_16, %c0_17], %20 {strides = array<i32>} : memref<1x128xf32, #tpu.memory_space<vmem>>, vector<1x128xf32>,
    %c0_18 = arith.constant 0 : index
    %c0_19 = arith.constant 0 : index
    %22 = vector.load %arg4[%c0_18, %c0_19] : memref<128x128xf32, #tpu.memory_space<vmem>>, vector<128x128xf32>
    %cst_20 = arith.constant dense<0.000000e+00> : vector<128x128xf32>
    %23 = tpu.matmul %3, %3, %cst_20 {dimension_numbers = #tpu.dot_dimension_numbers<[0], [0], [1], [1], [0, 1, 1, 1], [], []>} : vector<8x128xf32>, vector<8x128xf32>, vector<128x128xf32> -> vector<128x128xf32>
    %24 = arith.addf %22, %23 : vector<128x128xf32>
    %c0_21 = arith.constant 0 : index
    %c0_22 = arith.constant 0 : index
    %25 = vector.load %arg4[%c0_21, %c0_22] : memref<128x128xf32, #tpu.memory_space<vmem>>, vector<128x128xf32>
    tpu.vector_store %arg4[%c0_21, %c0_22], %24 {strides = array<i32>} : memref<128x128xf32, #tpu.memory_space<vmem>>, vector<128x128xf32>,
    %c0_23 = arith.constant 0 : index
    %c0_24 = arith.constant 0 : index
    %26 = vector.load %arg5[%c0_23, %c0_24] : memref<128x128xf32, #tpu.memory_space<vmem>>, vector<128x128xf32>
    %cst_25 = arith.constant dense<0.000000e+00> : vector<128x128xf32>
    %27 = tpu.matmul %4, %4, %cst_25 {dimension_numbers = #tpu.dot_dimension_numbers<[0], [0], [1], [1], [0, 1, 1, 1], [], []>} : vector<8x128xf32>, vector<8x128xf32>, vector<128x128xf32> -> vector<128x128xf32>
    %28 = arith.addf %26, %27 : vector<128x128xf32>
    %c0_26 = arith.constant 0 : index
    %c0_27 = arith.constant 0 : index
    %29 = vector.load %arg5[%c0_26, %c0_27] : memref<128x128xf32, #tpu.memory_space<vmem>>, vector<128x128xf32>
    tpu.vector_store %arg5[%c0_26, %c0_27], %28 {strides = array<i32>} : memref<128x128xf32, #tpu.memory_space<vmem>>, vector<128x128xf32>,
    %c0_i32_28 = arith.constant 0 : i32
    %30 = arith.cmpi eq, %arg0, %c0_i32_28 : i32
    %31 = arith.extui %30 : i1 to i32
    %c0_i32_29 = arith.constant 0 : i32
    %32 = arith.cmpi ne, %31, %c0_i32_29 : i32
    scf.if %32 {
      %c0_30 = arith.constant 0 : index
      %c0_31 = arith.constant 0 : index
      %33 = vector.load %arg6[%c0_30, %c0_31] : memref<1x128xf32, #tpu.memory_space<vmem>>, vector<1x128xf32>
      %cst_32 = arith.constant 1.250000e-01 : f32
      %34 = vector.broadcast %cst_32 : f32 to vector<1x128xf32>
      %35 = arith.mulf %33, %34 : vector<1x128xf32>
      %c0_33 = arith.constant 0 : index
      %c0_34 = arith.constant 0 : index
      %36 = vector.load %arg7[%c0_33, %c0_34] : memref<1x128xf32, #tpu.memory_space<vmem>>, vector<1x128xf32>
      %cst_35 = arith.constant 1.250000e-01 : f32
      %37 = vector.broadcast %cst_35 : f32 to vector<1x128xf32>
      %38 = arith.mulf %36, %37 : vector<1x128xf32>
      %c0_36 = arith.constant 0 : index
      %c0_37 = arith.constant 0 : index
      %39 = vector.load %arg4[%c0_36, %c0_37] : memref<128x128xf32, #tpu.memory_space<vmem>>, vector<128x128xf32>
      %c0_38 = arith.constant 0 : index
      %c0_39 = arith.constant 0 : index
      %40 = vector.load %arg5[%c0_38, %c0_39] : memref<128x128xf32, #tpu.memory_space<vmem>>, vector<128x128xf32>
      %41 = tpu.iota {dimensions = array<i32: 0>} : vector<128x128xi32>
      %42 = tpu.iota {dimensions = array<i32: 1>} : vector<128x128xi32>
      %43 = arith.cmpi eq, %41, %42 : vector<128x128xi32>
      %cst_40 = arith.constant 0.000000e+00 : f32
      %44 = vector.broadcast %cst_40 : f32 to vector<128x128xf32>
      %45 = arith.select %43, %39, %44 : vector<128x128xi1>, vector<128x128xf32>
      %cst_41 = arith.constant dense<0.000000e+00> : vector<128xf32>
      %46 = vector.multi_reduction <add>, %45, %cst_41 [0] : vector<128x128xf32> to vector<128xf32>
      %47 = vector.shape_cast %46 : vector<128xf32> to vector<1x128xf32>
      %cst_42 = arith.constant 0.000000e+00 : f32
      %48 = vector.broadcast %cst_42 : f32 to vector<128x128xf32>
      %49 = arith.select %43, %40, %48 : vector<128x128xi1>, vector<128x128xf32>
      %cst_43 = arith.constant dense<0.000000e+00> : vector<128xf32>
      %50 = vector.multi_reduction <add>, %49, %cst_43 [0] : vector<128x128xf32> to vector<128xf32>
      %51 = vector.shape_cast %50 : vector<128xf32> to vector<1x128xf32>
      %cst_44 = arith.constant 8.000000e+00 : f32
      %52 = vector.broadcast %cst_44 : f32 to vector<1x128xf32>
      %53 = arith.mulf %52, %35 : vector<1x128xf32>
      %54 = arith.mulf %53, %35 : vector<1x128xf32>
      %55 = arith.subf %47, %54 : vector<1x128xf32>
      %cst_45 = arith.constant 8.000000e+00 : f32
      %56 = vector.broadcast %cst_45 : f32 to vector<1x128xf32>
      %57 = arith.mulf %56, %38 : vector<1x128xf32>
      %58 = arith.mulf %57, %38 : vector<1x128xf32>
      %59 = arith.subf %51, %58 : vector<1x128xf32>
      %60 = tpu.iota {dimensions = array<i32: 1>} : vector<1x128xi32>
      %c32_i32 = arith.constant 32 : i32
      %61 = vector.broadcast %c32_i32 : i32 to vector<1x128xi32>
      %62 = arith.cmpi slt, %60, %61 : vector<1x128xi32>
      %cst_46 = arith.constant 0.142857149 : f32
      %63 = vector.broadcast %cst_46 : f32 to vector<1x128xf32>
      %64 = arith.mulf %55, %63 : vector<1x128xf32>
      %cst_47 = arith.constant 9.99999974E-5 : f32
      %65 = vector.broadcast %cst_47 : f32 to vector<1x128xf32>
      %66 = arith.addf %64, %65 : vector<1x128xf32>
      %67 = math.sqrt %66 : vector<1x128xf32>
      %cst_48 = arith.constant 0.142857149 : f32
      %68 = vector.broadcast %cst_48 : f32 to vector<1x128xf32>
      %69 = arith.mulf %59, %68 : vector<1x128xf32>
      %cst_49 = arith.constant 9.99999974E-5 : f32
      %70 = vector.broadcast %cst_49 : f32 to vector<1x128xf32>
      %71 = arith.addf %69, %70 : vector<1x128xf32>
      %72 = math.sqrt %71 : vector<1x128xf32>
      %cst_50 = arith.constant 1.000000e+00 : f32
      %73 = vector.broadcast %cst_50 : f32 to vector<1x128xf32>
      %74 = arith.subf %73, %67 : vector<1x128xf32>
      %cst_51 = arith.constant 0.000000e+00 : f32
      %75 = vector.broadcast %cst_51 : f32 to vector<1x128xf32>
      %76 = arith.maximumf %74, %75 : vector<1x128xf32>
      %cst_52 = arith.constant 0.000000e+00 : f32
      %77 = vector.broadcast %cst_52 : f32 to vector<1x128xf32>
      %78 = arith.select %62, %76, %77 : vector<1x128xi1>, vector<1x128xf32>
      %79 = vector.shape_cast %78 : vector<1x128xf32> to vector<1x1x128xf32>
      %cst_53 = arith.constant dense<0.000000e+00> : vector<1xf32>
      %80 = vector.multi_reduction <add>, %79, %cst_53 [1, 2] : vector<1x1x128xf32> to vector<1xf32>
      %81 = vector.shape_cast %80 : vector<1xf32> to vector<1x1x1xf32>
      %82 = vector.extract %81[0, 0, 0] : f32 from vector<1x1x1xf32>
      %cst_54 = arith.constant 1.000000e+00 : f32
      %83 = vector.broadcast %cst_54 : f32 to vector<1x128xf32>
      %84 = arith.subf %83, %72 : vector<1x128xf32>
      %cst_55 = arith.constant 0.000000e+00 : f32
      %85 = vector.broadcast %cst_55 : f32 to vector<1x128xf32>
      %86 = arith.maximumf %84, %85 : vector<1x128xf32>
      %cst_56 = arith.constant 0.000000e+00 : f32
      %87 = vector.broadcast %cst_56 : f32 to vector<1x128xf32>
      %88 = arith.select %62, %86, %87 : vector<1x128xi1>, vector<1x128xf32>
      %89 = vector.shape_cast %88 : vector<1x128xf32> to vector<1x1x128xf32>
      %cst_57 = arith.constant dense<0.000000e+00> : vector<1xf32>
      %90 = vector.multi_reduction <add>, %89, %cst_57 [1, 2] : vector<1x1x128xf32> to vector<1xf32>
      %91 = vector.shape_cast %90 : vector<1xf32> to vector<1x1x1xf32>
      %92 = vector.extract %91[0, 0, 0] : f32 from vector<1x1x1xf32>
      %93 = arith.addf %82, %92 : f32
      %cst_58 = arith.constant 6.400000e+01 : f32
      %94 = arith.divf %93, %cst_58 : f32
      %cst_59 = arith.constant dense<0.000000e+00> : vector<1x128xf32>
      %95 = tpu.matmul %35, %39, %cst_59 {dimension_numbers = #tpu.dot_dimension_numbers<[1], [0], [0], [1], [0, 0, 1, 1], [], []>} : vector<1x128xf32>, vector<128x128xf32>, vector<1x128xf32> -> vector<1x128xf32>
      %cst_60 = arith.constant dense<0.000000e+00> : vector<1x128xf32>
      %96 = tpu.matmul %38, %40, %cst_60 {dimension_numbers = #tpu.dot_dimension_numbers<[1], [0], [0], [1], [0, 0, 1, 1], [], []>} : vector<1x128xf32>, vector<128x128xf32>, vector<1x128xf32> -> vector<1x128xf32>
      %97 = arith.mulf %95, %35 : vector<1x128xf32>
      %98 = vector.shape_cast %97 : vector<1x128xf32> to vector<1x1x128xf32>
      %cst_61 = arith.constant dense<0.000000e+00> : vector<1xf32>
      %99 = vector.multi_reduction <add>, %98, %cst_61 [1, 2] : vector<1x1x128xf32> to vector<1xf32>
      %100 = vector.shape_cast %99 : vector<1xf32> to vector<1x1x1xf32>
      %101 = vector.extract %100[0, 0, 0] : f32 from vector<1x1x1xf32>
      %102 = arith.mulf %96, %38 : vector<1x128xf32>
      %103 = vector.shape_cast %102 : vector<1x128xf32> to vector<1x1x128xf32>
      %cst_62 = arith.constant dense<0.000000e+00> : vector<1xf32>
      %104 = vector.multi_reduction <add>, %103, %cst_62 [1, 2] : vector<1x1x128xf32> to vector<1xf32>
      %105 = vector.shape_cast %104 : vector<1xf32> to vector<1x1x1xf32>
      %106 = vector.extract %105[0, 0, 0] : f32 from vector<1x1x1xf32>
      %107 = arith.mulf %35, %35 : vector<1x128xf32>
      %108 = vector.shape_cast %107 : vector<1x128xf32> to vector<1x1x128xf32>
      %cst_63 = arith.constant dense<0.000000e+00> : vector<1xf32>
      %109 = vector.multi_reduction <add>, %108, %cst_63 [1, 2] : vector<1x1x128xf32> to vector<1xf32>
      %110 = vector.shape_cast %109 : vector<1xf32> to vector<1x1x1xf32>
      %111 = vector.extract %110[0, 0, 0] : f32 from vector<1x1x1xf32>
      %112 = arith.mulf %38, %38 : vector<1x128xf32>
      %113 = vector.shape_cast %112 : vector<1x128xf32> to vector<1x1x128xf32>
      %cst_64 = arith.constant dense<0.000000e+00> : vector<1xf32>
      %114 = vector.multi_reduction <add>, %113, %cst_64 [1, 2] : vector<1x1x128xf32> to vector<1xf32>
      %115 = vector.shape_cast %114 : vector<1xf32> to vector<1x1x1xf32>
      %116 = vector.extract %115[0, 0, 0] : f32 from vector<1x1x1xf32>
      %117 = arith.mulf %39, %39 : vector<128x128xf32>
      %118 = vector.shape_cast %117 : vector<128x128xf32> to vector<1x128x128xf32>
      %cst_65 = arith.constant dense<0.000000e+00> : vector<1xf32>
      %119 = vector.multi_reduction <add>, %118, %cst_65 [1, 2] : vector<1x128x128xf32> to vector<1xf32>
      %120 = vector.shape_cast %119 : vector<1xf32> to vector<1x1x1xf32>
      %121 = vector.extract %120[0, 0, 0] : f32 from vector<1x1x1xf32>
      %122 = arith.mulf %40, %40 : vector<128x128xf32>
      %123 = vector.shape_cast %122 : vector<128x128xf32> to vector<1x128x128xf32>
      %cst_66 = arith.constant dense<0.000000e+00> : vector<1xf32>
      %124 = vector.multi_reduction <add>, %123, %cst_66 [1, 2] : vector<1x128x128xf32> to vector<1xf32>
      %125 = vector.shape_cast %124 : vector<1xf32> to vector<1x1x1xf32>
      %126 = vector.extract %125[0, 0, 0] : f32 from vector<1x1x1xf32>
      %cst_67 = arith.constant 1.600000e+01 : f32
      %127 = arith.mulf %cst_67, %101 : f32
      %128 = arith.subf %121, %127 : f32
      %cst_68 = arith.constant 6.400000e+01 : f32
      %129 = arith.mulf %cst_68, %111 : f32
      %130 = arith.mulf %129, %111 : f32
      %131 = arith.addf %128, %130 : f32
      %cst_69 = arith.constant 1.600000e+01 : f32
      %132 = arith.mulf %cst_69, %106 : f32
      %133 = arith.subf %126, %132 : f32
      %cst_70 = arith.constant 6.400000e+01 : f32
      %134 = arith.mulf %cst_70, %116 : f32
      %135 = arith.mulf %134, %116 : f32
      %136 = arith.addf %133, %135 : f32
      %137 = arith.mulf %55, %55 : vector<1x128xf32>
      %138 = vector.shape_cast %137 : vector<1x128xf32> to vector<1x1x128xf32>
      %cst_71 = arith.constant dense<0.000000e+00> : vector<1xf32>
      %139 = vector.multi_reduction <add>, %138, %cst_71 [1, 2] : vector<1x1x128xf32> to vector<1xf32>
      %140 = vector.shape_cast %139 : vector<1xf32> to vector<1x1x1xf32>
      %141 = vector.extract %140[0, 0, 0] : f32 from vector<1x1x1xf32>
      %142 = arith.subf %131, %141 : f32
      %143 = arith.mulf %59, %59 : vector<1x128xf32>
      %144 = vector.shape_cast %143 : vector<1x128xf32> to vector<1x1x128xf32>
      %cst_72 = arith.constant dense<0.000000e+00> : vector<1xf32>
      %145 = vector.multi_reduction <add>, %144, %cst_72 [1, 2] : vector<1x1x128xf32> to vector<1xf32>
      %146 = vector.shape_cast %145 : vector<1xf32> to vector<1x1x1xf32>
      %147 = vector.extract %146[0, 0, 0] : f32 from vector<1x1x1xf32>
      %148 = arith.subf %136, %147 : f32
      %149 = arith.addf %142, %148 : f32
      %cst_73 = arith.constant 0.0204081628 : f32
      %150 = arith.mulf %149, %cst_73 : f32
      %cst_74 = arith.constant 3.200000e+01 : f32
      %151 = arith.divf %150, %cst_74 : f32
      %c0_75 = arith.constant 0 : index
      %c0_76 = arith.constant 0 : index
      %152 = vector.load %arg8[%c0_75, %c0_76] : memref<1x128xf32, #tpu.memory_space<vmem>>, vector<1x128xf32>
      %153 = vector.shape_cast %152 : vector<1x128xf32> to vector<1x1x128xf32>
      %cst_77 = arith.constant dense<0.000000e+00> : vector<1xf32>
      %154 = vector.multi_reduction <add>, %153, %cst_77 [1, 2] : vector<1x1x128xf32> to vector<1xf32>
      %155 = vector.shape_cast %154 : vector<1xf32> to vector<1x1x1xf32>
      %156 = vector.extract %155[0, 0, 0] : f32 from vector<1x1x1xf32>
      %cst_78 = arith.constant 2.560000e+02 : f32
      %157 = arith.divf %156, %cst_78 : f32
      %cst_79 = arith.constant 2.500000e+01 : f32
      %158 = arith.mulf %cst_79, %157 : f32
      %cst_80 = arith.constant 2.500000e+01 : f32
      %159 = arith.mulf %cst_80, %94 : f32
      %160 = arith.addf %158, %159 : f32
      %cst_81 = arith.constant 1.000000e+00 : f32
      %161 = arith.mulf %cst_81, %151 : f32
      %162 = arith.addf %160, %161 : f32
      %c0_82 = arith.constant 0 : index
      %c0_83 = arith.constant 0 : index
      %163 = memref.load %arg3[%c0_82, %c0_83] : memref<1x1xf32, #tpu.memory_space<smem>>
      memref.store %162, %arg3[%c0_82, %c0_83] : memref<1x1xf32, #tpu.memory_space<smem>>
    } else {
    }
    return
  }
  func.func @transform_0(%arg0: i32) -> (i32, i32) {
    %c0_i32 = arith.constant 0 : i32
    %c0_i32_0 = arith.constant 0 : i32
    return %arg0, %c0_i32 : i32, i32
  }
  func.func @transform_1(%arg0: i32) -> (i32, i32) {
    %c0_i32 = arith.constant 0 : i32
    %c0_i32_0 = arith.constant 0 : i32
    return %arg0, %c0_i32 : i32, i32
  }
  func.func @transform_2(%arg0: i32) -> (i32, i32) {
    %c0_i32 = arith.constant 0 : i32
    %c0_i32_0 = arith.constant 0 : i32
    %c0_i32_1 = arith.constant 0 : i32
    return %c0_i32, %c0_i32_0 : i32, i32
  }
}

</mosaic_0001>

<llo_original>
// kernel: tpu_custom_call.1
$region0: #{tpu_custom_call.1}
  #allocation0 [shape = 'u32[]', space=smem, size = 0x4, offset = 0x4, fixed_abs, tag = 'smem constant byte address 0x4 - core index']
  #allocation1 [shape = 'u32[72,128]{1,0:T(1,128)}', space=vmem, size = 0x9000, scoped, tag = 'internal scratch']
  #allocation2 [shape = 'f32[128,128]{1,0:T(8,128)}', space=vmem, size = 0x10000, scoped, tag = 'scratch operand']
  #allocation3 [shape = 'f32[128,128]{1,0:T(8,128)}', space=vmem, size = 0x10000, scoped, tag = 'scratch operand']
  #allocation4 [shape = 'f32[1,128]{1,0:T(1,128)}', space=vmem, size = 0x200, scoped, tag = 'scratch operand']
  #allocation5 [shape = 'f32[1,128]{1,0:T(1,128)}', space=vmem, size = 0x200, scoped, tag = 'scratch operand']
  #allocation6 [shape = 'f32[1,128]{1,0:T(1,128)}', space=vmem, size = 0x200, scoped, tag = 'scratch operand']
  %s0 = inlined_call_operand.hbm [shape: f32[8,128], index: 0, kind: input, shape index: {}]
  %s1 = inlined_call_operand.hbm [shape: f32[8,128], index: 1, kind: input, shape index: {}]
  %s2 = inlined_call_operand.hbm [shape: f32[1,1], index: 2, kind: output, shape index: {}]
  %s3 = sld [smem:[#allocation0]]
  $region34: #{tpu_custom_call.1} parent=0
    _
  %s5 = ssub.s32 1, %s3
  %s6 = scalar_select 0, %s5, %s3
  $region1: #{tpu_custom_call.1} parent=0
    #allocation7 [shape = 'u8[4096]{0}', space=vmem, size = 0x1000, scoped, tag = 'input window, operand 0, single buffered']
    #allocation8 [shape = 's32[1]{0}', space=sflag, size = 0x4, scoped, tag = 'scoped memory for tpu_custom_call.1']
    #allocation9 [shape = 's32[1]{0}', space=sflag, size = 0x4, scoped, tag = 'scoped memory for tpu_custom_call.1']
    #allocation10 [shape = 'u8[4096]{0}', space=vmem, size = 0x1000, scoped, tag = 'input window, operand 1, single buffered']
    #allocation11 [shape = 's32[1]{0}', space=sflag, size = 0x4, scoped, tag = 'scoped memory for tpu_custom_call.1']
    #allocation12 [shape = 'u8[512]{0}', space=smem, size = 0x200, scoped, tag = 'output window, operand 0, single buffered']
    %7 = vsyncpa [#allocation8], 0
    %8 = vsyncpa [#allocation11], 0
    %9 = vsyncpa [#allocation9], 0
    // Predicated region
    $region2: #{tpu_custom_call.1} parent=1 // pred_check
      _
    $region3: #{tpu_custom_call.1} parent=1 // pred_check_branch
      %11 = sbr.rel (0) target = $region5
    $region4: #{tpu_custom_call.1} parent=1 // pred_region
      %13 = vsyncadd [#allocation8], 0
      %s15 = sshll.u32 %s0, 4
      %s16 = int_to_ptr.hbm [resolvable:$true] %s15
      %s17 = sshll.u32 [#allocation7], 4
      %s18 = int_to_ptr.vmem [resolvable:$true] %s17
      %20 = dma.hbm_to_vmem [thread:$0]  %s16, 128, %s18, [#allocation8]
    $region5: #{tpu_custom_call.1} parent=1 // pred_fallthru
      _
    // Predicated region
    $region6: #{tpu_custom_call.1} parent=1 // pred_check
      _
    $region7: #{tpu_custom_call.1} parent=1 // pred_check_branch
      %22 = sbr.rel (0) target = $region9
    $region8: #{tpu_custom_call.1} parent=1 // pred_region
      %24 = vsyncadd [#allocation11], 0
      %s26 = sshll.u32 %s1, 4
      %s27 = int_to_ptr.hbm [resolvable:$true] %s26
      %s28 = sshll.u32 [#allocation10], 4
      %s29 = int_to_ptr.vmem [resolvable:$true] %s28
      %31 = dma.hbm_to_vmem [thread:$0]  %s27, 128, %s29, [#allocation11]
    $region9: #{tpu_custom_call.1} parent=1 // pred_fallthru
      _
    // Predicated region
    $region10: #{tpu_custom_call.1} parent=1 // pred_check
      _
    $region11: #{tpu_custom_call.1} parent=1 // pred_check_branch
      %33 = sbr.rel (0) target = $region13
    $region12: #{tpu_custom_call.1} parent=1 // pred_region
      %35 = dma.done [#allocation8], 128
    $region13: #{tpu_custom_call.1} parent=1 // pred_fallthru
      _
    // Predicated region
    $region14: #{tpu_custom_call.1} parent=1 // pred_check
      _
    $region15: #{tpu_custom_call.1} parent=1 // pred_check_branch
      %37 = sbr.rel (0) target = $region17
    $region16: #{tpu_custom_call.1} parent=1 // pred_region
      %39 = dma.done [#allocation11], 128
    $region17: #{tpu_custom_call.1} parent=1 // pred_fallthru
      _
    %p40 = scmp.eq.s32.totalorder 0, 0
    // Predicated region
    $region18: #{tpu_custom_call.1} parent=1 // pred_check
      %p41 = pneg %p40
    $region19: #{tpu_custom_call.1} parent=1 // pred_check_branch
      %43 = sbr.rel (%p41) target = $region21
    $region20: #{tpu_custom_call.1} parent=1 // pred_region
      %44 = vst [vmem:[#allocation2] sm:$0xff] 0.0
      %45 = vst [vmem:[#allocation2 + $0x8] sm:$0xff] 0.0
      %46 = vst [vmem:[#allocation2 + $0x10] sm:$0xff] 0.0
      %47 = vst [vmem:[#allocation2 + $0x18] sm:$0xff] 0.0
      %48 = vst [vmem:[#allocation2 + $0x20] sm:$0xff] 0.0
      %49 = vst [vmem:[#allocation2 + $0x28] sm:$0xff] 0.0
      %50 = vst [vmem:[#allocation2 + $0x30] sm:$0xff] 0.0
      %51 = vst [vmem:[#allocation2 + $0x38] sm:$0xff] 0.0
      %52 = vst [vmem:[#allocation2 + $0x40] sm:$0xff] 0.0
      %53 = vst [vmem:[#allocation2 + $0x48] sm:$0xff] 0.0
      %54 = vst [vmem:[#allocation2 + $0x50] sm:$0xff] 0.0
      %55 = vst [vmem:[#allocation2 + $0x58] sm:$0xff] 0.0
      %56 = vst [vmem:[#allocation2 + $0x60] sm:$0xff] 0.0
      %57 = vst [vmem:[#allocation2 + $0x68] sm:$0xff] 0.0
      %58 = vst [vmem:[#allocation2 + $0x70] sm:$0xff] 0.0
      %59 = vst [vmem:[#allocation2 + $0x78] sm:$0xff] 0.0
      %60 = vst [vmem:[#allocation3] sm:$0xff] 0.0
      %61 = vst [vmem:[#allocation3 + $0x8] sm:$0xff] 0.0
      %62 = vst [vmem:[#allocation3 + $0x10] sm:$0xff] 0.0
      %63 = vst [vmem:[#allocation3 + $0x18] sm:$0xff] 0.0
      %64 = vst [vmem:[#allocation3 + $0x20] sm:$0xff] 0.0
      %65 = vst [vmem:[#allocation3 + $0x28] sm:$0xff] 0.0
      %66 = vst [vmem:[#allocation3 + $0x30] sm:$0xff] 0.0
      %67 = vst [vmem:[#allocation3 + $0x38] sm:$0xff] 0.0
      %68 = vst [vmem:[#allocation3 + $0x40] sm:$0xff] 0.0
      %69 = vst [vmem:[#allocation3 + $0x48] sm:$0xff] 0.0
      %70 = vst [vmem:[#allocation3 + $0x50] sm:$0xff] 0.0
      %71 = vst [vmem:[#allocation3 + $0x58] sm:$0xff] 0.0
      %72 = vst [vmem:[#allocation3 + $0x60] sm:$0xff] 0.0
      %73 = vst [vmem:[#allocation3 + $0x68] sm:$0xff] 0.0
      %74 = vst [vmem:[#allocation3 + $0x70] sm:$0xff] 0.0
      %75 = vst [vmem:[#allocation3 + $0x78] sm:$0xff] 0.0
      %76 = vst [vmem:[#allocation4] sm:$0x1] 0.0
      %77 = vst [vmem:[#allocation5] sm:$0x1] 0.0
      %78 = vst [vmem:[#allocation6] sm:$0x1] 0.0
    $region21: #{tpu_custom_call.1} parent=1 // pred_fallthru
      _
    %v79 = vld [vmem:[#allocation7] sm:$0xff]
    %v80 = vld [vmem:[#allocation10] sm:$0xff]
    %v81 = vsub.f32 %v79, %v80
    %v82 = vld [vmem:[#allocation6] sm:$0x1]
    %v83 = vmul.f32 %v81, %v81
    %v84 = vrot.slane %v83, 4
    %v85 = vadd.f32 %v83, %v84
    %v86 = vrot.slane %v85, 2
    %v87 = vadd.f32 %v85, %v86
    %v88 = vrot.slane %v87, 1
    %v89 = vadd.f32 %v87, %v88
    %v90 = vadd.f32 %v82, %v89
    %91 = vst [vmem:[#allocation6] sm:$0x1] %v90
    %v92 = vld [vmem:[#allocation4] sm:$0x1]
    %v93 = vrot.slane %v79, 4
    %v94 = vadd.f32 %v79, %v93
    %v95 = vrot.slane %v94, 2
    %v96 = vadd.f32 %v94, %v95
    %v97 = vrot.slane %v96, 1
    %v98 = vadd.f32 %v96, %v97
    %v99 = vadd.f32 %v92, %v98
    %100 = vst [vmem:[#allocation4] sm:$0x1] %v99
    %v101 = vld [vmem:[#allocation5] sm:$0x1]
    %v102 = vrot.slane %v80, 4
    %v103 = vadd.f32 %v80, %v102
    %v104 = vrot.slane %v103, 2
    %v105 = vadd.f32 %v103, %v104
    %v106 = vrot.slane %v105, 1
    %v107 = vadd.f32 %v105, %v106
    %v108 = vadd.f32 %v101, %v107
    %109 = vst [vmem:[#allocation5] sm:$0x1] %v108
    %v110 = vld [vmem:[#allocation2] sm:$0xff]
    %v111 = vld [vmem:[#allocation2 + $0x8] sm:$0xff]
    %v112 = vld [vmem:[#allocation2 + $0x10] sm:$0xff]
    %v113 = vld [vmem:[#allocation2 + $0x18] sm:$0xff]
    %v114 = vld [vmem:[#allocation2 + $0x20] sm:$0xff]
    %v115 = vld [vmem:[#allocation2 + $0x28] sm:$0xff]
    %v116 = vld [vmem:[#allocation2 + $0x30] sm:$0xff]
    %v117 = vld [vmem:[#allocation2 + $0x38] sm:$0xff]
    %v118 = vld [vmem:[#allocation2 + $0x40] sm:$0xff]
    %v119 = vld [vmem:[#allocation2 + $0x48] sm:$0xff]
    %v120 = vld [vmem:[#allocation2 + $0x50] sm:$0xff]
    %v121 = vld [vmem:[#allocation2 + $0x58] sm:$0xff]
    %v122 = vld [vmem:[#allocation2 + $0x60] sm:$0xff]
    %v123 = vld [vmem:[#allocation2 + $0x68] sm:$0xff]
    %v124 = vld [vmem:[#allocation2 + $0x70] sm:$0xff]
    %v125 = vld [vmem:[#allocation2 + $0x78] sm:$0xff]
    %126 = vxpose.xlu0.b32.start [1/16] %v79, 128
    %127 = vxpose.xlu0.b32.cont [2/16] 0.0, 128
    %128 = vxpose.xlu0.b32.cont [3/16] 0.0, 128
    %129 = vxpose.xlu0.b32.cont [4/16] 0.0, 128
    %130 = vxpose.xlu0.b32.cont [5/16] 0.0, 128
    %131 = vxpose.xlu0.b32.cont [6/16] 0.0, 128
    %132 = vxpose.xlu0.b32.cont [7/16] 0.0, 128
    %133 = vxpose.xlu0.b32.cont [8/16] 0.0, 128
    %134 = vxpose.xlu0.b32.cont [9/16] 0.0, 128
    %135 = vxpose.xlu0.b32.cont [10/16] 0.0, 128
    %136 = vxpose.xlu0.b32.cont [11/16] 0.0, 128
    %137 = vxpose.xlu0.b32.cont [12/16] 0.0, 128
    %138 = vxpose.xlu0.b32.cont [13/16] 0.0, 128
    %139 = vxpose.xlu0.b32.cont [14/16] 0.0, 128
    %140 = vxpose.xlu0.b32.cont [15/16] 0.0, 128
    %141 = vxpose.xlu0.b32.end [16/16] 0.0, 128
    %v142 = vpop.trf.xlu0
    %v143 = vpop.trf.xlu0
    %v144 = vpop.trf.xlu0
    %v145 = vpop.trf.xlu0
    %v146 = vpop.trf.xlu0
    %v147 = vpop.trf.xlu0
    %v148 = vpop.trf.xlu0
    %v149 = vpop.trf.xlu0
    %v150 = vpop.trf.xlu0
    %v151 = vpop.trf.xlu0
    %v152 = vpop.trf.xlu0
    %v153 = vpop.trf.xlu0
    %v154 = vpop.trf.xlu0
    %v155 = vpop.trf.xlu0
    %v156 = vpop.trf.xlu0
    %v157 = vpop.trf.xlu0
    %vm158 = vcmask 64512
    %v160 = vsel %vm158, %v142, 0
    %v163 = vsel %vm158, %v143, 0
    %v166 = vsel %vm158, %v144, 0
    %v169 = vsel %vm158, %v145, 0
    %v172 = vsel %vm158, %v146, 0
    %v175 = vsel %vm158, %v147, 0
    %v178 = vsel %vm158, %v148, 0
    %v181 = vsel %vm158, %v149, 0
    %v184 = vsel %vm158, %v150, 0
    %v187 = vsel %vm158, %v151, 0
    %v190 = vsel %vm158, %v152, 0
    %v193 = vsel %vm158, %v153, 0
    %v196 = vsel %vm158, %v154, 0
    %v199 = vsel %vm158, %v155, 0
    %v202 = vsel %vm158, %v156, 0
    %v205 = vsel %vm158, %v157, 0
    %207 = vmatpush.msra.mxu0 0.0
    %208 = vmatpush.msra.mxu0 0.0
    %209 = vmatpush.msra.mxu0 0.0
    %210 = vmatpush.msra.mxu0 0.0
    %211 = vmatpush.msra.mxu0 0.0
    %212 = vmatpush.msra.mxu0 0.0
    %213 = vmatpush.msra.mxu0 0.0
    %214 = vmatpush.msra.mxu0 0.0
    %215 = vmatpush.msra.mxu0 0.0
    %216 = vmatpush.msra.mxu0 0.0
    %217 = vmatpush.msra.mxu0 0.0
    %218 = vmatpush.msra.mxu0 0.0
    %219 = vmatpush.msra.mxu0 0.0
    %220 = vmatpush.msra.mxu0 0.0
    %221 = vmatpush.msra.mxu0 0.0
    %222 = vmatpush.msra.mxu0 %v79
    %223 = vmatmul.f32.gmra.mxu0 %v160
    %v224 = vpop.f32.mrf.mxu0
    %v225 = vadd.f32 0.0, %v224
    %226 = vmatmul.f32.gmra.mxu0 %v163
    %v227 = vpop.f32.mrf.mxu0
    %v228 = vadd.f32 0.0, %v227
    %229 = vmatmul.f32.gmra.mxu0 %v166
    %v230 = vpop.f32.mrf.mxu0
    %v231 = vadd.f32 0.0, %v230
    %232 = vmatmul.f32.gmra.mxu0 %v169
    %v233 = vpop.f32.mrf.mxu0
    %v234 = vadd.f32 0.0, %v233
    %235 = vmatmul.f32.gmra.mxu0 %v172
    %v236 = vpop.f32.mrf.mxu0
    %v237 = vadd.f32 0.0, %v236
    %238 = vmatmul.f32.gmra.mxu0 %v175
    %v239 = vpop.f32.mrf.mxu0
    %v240 = vadd.f32 0.0, %v239
    %241 = vmatmul.f32.gmra.mxu0 %v178
    %v242 = vpop.f32.mrf.mxu0
    %v243 = vadd.f32 0.0, %v242
    %244 = vmatmul.f32.gmra.mxu0 %v181
    %v245 = vpop.f32.mrf.mxu0
    %v246 = vadd.f32 0.0, %v245
    %247 = vmatmul.f32.gmra.mxu0 %v184
    %v248 = vpop.f32.mrf.mxu0
    %v249 = vadd.f32 0.0, %v248
    %250 = vmatmul.f32.gmra.mxu0 %v187
    %v251 = vpop.f32.mrf.mxu0
    %v252 = vadd.f32 0.0, %v251
    %253 = vmatmul.f32.gmra.mxu0 %v190
    %v254 = vpop.f32.mrf.mxu0
    %v255 = vadd.f32 0.0, %v254
    %256 = vmatmul.f32.gmra.mxu0 %v193
    %v257 = vpop.f32.mrf.mxu0
    %v258 = vadd.f32 0.0, %v257
    %259 = vmatmul.f32.gmra.mxu0 %v196
    %v260 = vpop.f32.mrf.mxu0
    %v261 = vadd.f32 0.0, %v260
    %262 = vmatmul.f32.gmra.mxu0 %v199
    %v263 = vpop.f32.mrf.mxu0
    %v264 = vadd.f32 0.0, %v263
    %265 = vmatmul.f32.gmra.mxu0 %v202
    %v266 = vpop.f32.mrf.mxu0
    %v267 = vadd.f32 0.0, %v266
    %268 = vmatmul.f32.gmra.mxu0 %v205
    %v269 = vpop.f32.mrf.mxu0
    %v270 = vadd.f32 0.0, %v269
    %271 = vdwg.mxu0
    %v272 = vadd.f32 %v110, %v225
    %v273 = vadd.f32 %v111, %v228
    %v274 = vadd.f32 %v112, %v231
    %v275 = vadd.f32 %v113, %v234
    %v276 = vadd.f32 %v114, %v237
    %v277 = vadd.f32 %v115, %v240
    %v278 = vadd.f32 %v116, %v243
    %v279 = vadd.f32 %v117, %v246
    %v280 = vadd.f32 %v118, %v249
    %v281 = vadd.f32 %v119, %v252
    %v282 = vadd.f32 %v120, %v255
    %v283 = vadd.f32 %v121, %v258
    %v284 = vadd.f32 %v122, %v261
    %v285 = vadd.f32 %v123, %v264
    %v286 = vadd.f32 %v124, %v267
    %v287 = vadd.f32 %v125, %v270
    %288 = vst [vmem:[#allocation2] sm:$0xff] %v272
    %289 = vst [vmem:[#allocation2 + $0x8] sm:$0xff] %v273
    %290 = vst [vmem:[#allocation2 + $0x10] sm:$0xff] %v274
    %291 = vst [vmem:[#allocation2 + $0x18] sm:$0xff] %v275
    %292 = vst [vmem:[#allocation2 + $0x20] sm:$0xff] %v276
    %293 = vst [vmem:[#allocation2 + $0x28] sm:$0xff] %v277
    %294 = vst [vmem:[#allocation2 + $0x30] sm:$0xff] %v278
    %295 = vst [vmem:[#allocation2 + $0x38] sm:$0xff] %v279
    %296 = vst [vmem:[#allocation2 + $0x40] sm:$0xff] %v280
    %297 = vst [vmem:[#allocation2 + $0x48] sm:$0xff] %v281
    %298 = vst [vmem:[#allocation2 + $0x50] sm:$0xff] %v282
    %299 = vst [vmem:[#allocation2 + $0x58] sm:$0xff] %v283
    %300 = vst [vmem:[#allocation2 + $0x60] sm:$0xff] %v284
    %301 = vst [vmem:[#allocation2 + $0x68] sm:$0xff] %v285
    %302 = vst [vmem:[#allocation2 + $0x70] sm:$0xff] %v286
    %303 = vst [vmem:[#allocation2 + $0x78] sm:$0xff] %v287
    %v304 = vld [vmem:[#allocation3] sm:$0xff]
    %v305 = vld [vmem:[#allocation3 + $0x8] sm:$0xff]
    %v306 = vld [vmem:[#allocation3 + $0x10] sm:$0xff]
    %v307 = vld [vmem:[#allocation3 + $0x18] sm:$0xff]
    %v308 = vld [vmem:[#allocation3 + $0x20] sm:$0xff]
    %v309 = vld [vmem:[#allocation3 + $0x28] sm:$0xff]
    %v310 = vld [vmem:[#allocation3 + $0x30] sm:$0xff]
    %v311 = vld [vmem:[#allocation3 + $0x38] sm:$0xff]
    %v312 = vld [vmem:[#allocation3 + $0x40] sm:$0xff]
    %v313 = vld [vmem:[#allocation3 + $0x48] sm:$0xff]
    %v314 = vld [vmem:[#allocation3 + $0x50] sm:$0xff]
    %v315 = vld [vmem:[#allocation3 + $0x58] sm:$0xff]
    %v316 = vld [vmem:[#allocation3 + $0x60] sm:$0xff]
    %v317 = vld [vmem:[#allocation3 + $0x68] sm:$0xff]
    %v318 = vld [vmem:[#allocation3 + $0x70] sm:$0xff]
    %v319 = vld [vmem:[#allocation3 + $0x78] sm:$0xff]
    %320 = vxpose.xlu0.b32.start [1/16] %v80, 128
    %321 = vxpose.xlu0.b32.cont [2/16] 0.0, 128
    %322 = vxpose.xlu0.b32.cont [3/16] 0.0, 128
    %323 = vxpose.xlu0.b32.cont [4/16] 0.0, 128
    %324 = vxpose.xlu0.b32.cont [5/16] 0.0, 128
    %325 = vxpose.xlu0.b32.cont [6/16] 0.0, 128
    %326 = vxpose.xlu0.b32.cont [7/16] 0.0, 128
    %327 = vxpose.xlu0.b32.cont [8/16] 0.0, 128
    %328 = vxpose.xlu0.b32.cont [9/16] 0.0, 128
    %329 = vxpose.xlu0.b32.cont [10/16] 0.0, 128
    %330 = vxpose.xlu0.b32.cont [11/16] 0.0, 128
    %331 = vxpose.xlu0.b32.cont [12/16] 0.0, 128
    %332 = vxpose.xlu0.b32.cont [13/16] 0.0, 128
    %333 = vxpose.xlu0.b32.cont [14/16] 0.0, 128
    %334 = vxpose.xlu0.b32.cont [15/16] 0.0, 128
    %335 = vxpose.xlu0.b32.end [16/16] 0.0, 128
    %v336 = vpop.trf.xlu0
    %v337 = vpop.trf.xlu0
    %v338 = vpop.trf.xlu0
    %v339 = vpop.trf.xlu0
    %v340 = vpop.trf.xlu0
    %v341 = vpop.trf.xlu0
    %v342 = vpop.trf.xlu0
    %v343 = vpop.trf.xlu0
    %v344 = vpop.trf.xlu0
    %v345 = vpop.trf.xlu0
    %v346 = vpop.trf.xlu0
    %v347 = vpop.trf.xlu0
    %v348 = vpop.trf.xlu0
    %v349 = vpop.trf.xlu0
    %v350 = vpop.trf.xlu0
    %v351 = vpop.trf.xlu0
    %v353 = vsel %vm158, %v336, 0
    %v356 = vsel %vm158, %v337, 0
    %v359 = vsel %vm158, %v338, 0
    %v362 = vsel %vm158, %v339, 0
    %v365 = vsel %vm158, %v340, 0
    %v368 = vsel %vm158, %v341, 0
    %v371 = vsel %vm158, %v342, 0
    %v374 = vsel %vm158, %v343, 0
    %v377 = vsel %vm158, %v344, 0
    %v380 = vsel %vm158, %v345, 0
    %v383 = vsel %vm158, %v346, 0
    %v386 = vsel %vm158, %v347, 0
    %v389 = vsel %vm158, %v348, 0
    %v392 = vsel %vm158, %v349, 0
    %v395 = vsel %vm158, %v350, 0
    %v398 = vsel %vm158, %v351, 0
    %400 = vmatpush.msra.mxu0 0.0
    %401 = vmatpush.msra.mxu0 0.0
    %402 = vmatpush.msra.mxu0 0.0
    %403 = vmatpush.msra.mxu0 0.0
    %404 = vmatpush.msra.mxu0 0.0
    %405 = vmatpush.msra.mxu0 0.0
    %406 = vmatpush.msra.mxu0 0.0
    %407 = vmatpush.msra.mxu0 0.0
    %408 = vmatpush.msra.mxu0 0.0
    %409 = vmatpush.msra.mxu0 0.0
    %410 = vmatpush.msra.mxu0 0.0
    %411 = vmatpush.msra.mxu0 0.0
    %412 = vmatpush.msra.mxu0 0.0
    %413 = vmatpush.msra.mxu0 0.0
    %414 = vmatpush.msra.mxu0 0.0
    %415 = vmatpush.msra.mxu0 %v80
    %416 = vmatmul.f32.gmra.mxu0 %v353
    %v417 = vpop.f32.mrf.mxu0
    %v418 = vadd.f32 0.0, %v417
    %419 = vmatmul.f32.gmra.mxu0 %v356
    %v420 = vpop.f32.mrf.mxu0
    %v421 = vadd.f32 0.0, %v420
    %422 = vmatmul.f32.gmra.mxu0 %v359
    %v423 = vpop.f32.mrf.mxu0
    %v424 = vadd.f32 0.0, %v423
    %425 = vmatmul.f32.gmra.mxu0 %v362
    %v426 = vpop.f32.mrf.mxu0
    %v427 = vadd.f32 0.0, %v426
    %428 = vmatmul.f32.gmra.mxu0 %v365
    %v429 = vpop.f32.mrf.mxu0
    %v430 = vadd.f32 0.0, %v429
    %431 = vmatmul.f32.gmra.mxu0 %v368
    %v432 = vpop.f32.mrf.mxu0
    %v433 = vadd.f32 0.0, %v432
    %434 = vmatmul.f32.gmra.mxu0 %v371
    %v435 = vpop.f32.mrf.mxu0
    %v436 = vadd.f32 0.0, %v435
    %437 = vmatmul.f32.gmra.mxu0 %v374
    %v438 = vpop.f32.mrf.mxu0
    %v439 = vadd.f32 0.0, %v438
    %440 = vmatmul.f32.gmra.mxu0 %v377
    %v441 = vpop.f32.mrf.mxu0
    %v442 = vadd.f32 0.0, %v441
    %443 = vmatmul.f32.gmra.mxu0 %v380
    %v444 = vpop.f32.mrf.mxu0
    %v445 = vadd.f32 0.0, %v444
    %446 = vmatmul.f32.gmra.mxu0 %v383
    %v447 = vpop.f32.mrf.mxu0
    %v448 = vadd.f32 0.0, %v447
    %449 = vmatmul.f32.gmra.mxu0 %v386
    %v450 = vpop.f32.mrf.mxu0
    %v451 = vadd.f32 0.0, %v450
    %452 = vmatmul.f32.gmra.mxu0 %v389
    %v453 = vpop.f32.mrf.mxu0
    %v454 = vadd.f32 0.0, %v453
    %455 = vmatmul.f32.gmra.mxu0 %v392
    %v456 = vpop.f32.mrf.mxu0
    %v457 = vadd.f32 0.0, %v456
    %458 = vmatmul.f32.gmra.mxu0 %v395
    %v459 = vpop.f32.mrf.mxu0
    %v460 = vadd.f32 0.0, %v459
    %461 = vmatmul.f32.gmra.mxu0 %v398
    %v462 = vpop.f32.mrf.mxu0
    %v463 = vadd.f32 0.0, %v462
    %464 = vdwg.mxu0
    %v465 = vadd.f32 %v304, %v418
    %v466 = vadd.f32 %v305, %v421
    %v467 = vadd.f32 %v306, %v424
    %v468 = vadd.f32 %v307, %v427
    %v469 = vadd.f32 %v308, %v430
    %v470 = vadd.f32 %v309, %v433
    %v471 = vadd.f32 %v310, %v436
    %v472 = vadd.f32 %v311, %v439
    %v473 = vadd.f32 %v312, %v442
    %v474 = vadd.f32 %v313, %v445
    %v475 = vadd.f32 %v314, %v448
    %v476 = vadd.f32 %v315, %v451
    %v477 = vadd.f32 %v316, %v454
    %v478 = vadd.f32 %v317, %v457
    %v479 = vadd.f32 %v318, %v460
    %v480 = vadd.f32 %v319, %v463
    %481 = vst [vmem:[#allocation3] sm:$0xff] %v465
    %482 = vst [vmem:[#allocation3 + $0x8] sm:$0xff] %v466
    %483 = vst [vmem:[#allocation3 + $0x10] sm:$0xff] %v467
    %484 = vst [vmem:[#allocation3 + $0x18] sm:$0xff] %v468
    %485 = vst [vmem:[#allocation3 + $0x20] sm:$0xff] %v469
    %486 = vst [vmem:[#allocation3 + $0x28] sm:$0xff] %v470
    %487 = vst [vmem:[#allocation3 + $0x30] sm:$0xff] %v471
    %488 = vst [vmem:[#allocation3 + $0x38] sm:$0xff] %v472
    %489 = vst [vmem:[#allocation3 + $0x40] sm:$0xff] %v473
    %490 = vst [vmem:[#allocation3 + $0x48] sm:$0xff] %v474
    %491 = vst [vmem:[#allocation3 + $0x50] sm:$0xff] %v475
    %492 = vst [vmem:[#allocation3 + $0x58] sm:$0xff] %v476
    %493 = vst [vmem:[#allocation3 + $0x60] sm:$0xff] %v477
    %494 = vst [vmem:[#allocation3 + $0x68] sm:$0xff] %v478
    %495 = vst [vmem:[#allocation3 + $0x70] sm:$0xff] %v479
    %496 = vst [vmem:[#allocation3 + $0x78] sm:$0xff] %v480
    // Predicated region
    $region22: #{tpu_custom_call.1} parent=1 // pred_check
      %p497 = pneg %p40
    $region23: #{tpu_custom_call.1} parent=1 // pred_check_branch
      %499 = sbr.rel (%p497) target = $region25
    $region24: #{tpu_custom_call.1} parent=1 // pred_region
      %v500 = vld [vmem:[#allocation4] sm:$0x1]
      %v501 = vmul.f32 %v500, 0.125
      %v502 = vld [vmem:[#allocation5] sm:$0x1]
      %v503 = vmul.f32 %v502, 0.125
      %v504 = vld [vmem:[#allocation2] sm:$0xff]
      %v505 = vld [vmem:[#allocation2 + $0x8] sm:$0xff]
      %v506 = vld [vmem:[#allocation2 + $0x10] sm:$0xff]
      %v507 = vld [vmem:[#allocation2 + $0x18] sm:$0xff]
      %v508 = vld [vmem:[#allocation2 + $0x20] sm:$0xff]
      %v509 = vld [vmem:[#allocation2 + $0x28] sm:$0xff]
      %v510 = vld [vmem:[#allocation2 + $0x30] sm:$0xff]
      %v511 = vld [vmem:[#allocation2 + $0x38] sm:$0xff]
      %v512 = vld [vmem:[#allocation2 + $0x40] sm:$0xff]
      %v513 = vld [vmem:[#allocation2 + $0x48] sm:$0xff]
      %v514 = vld [vmem:[#allocation2 + $0x50] sm:$0xff]
      %v515 = vld [vmem:[#allocation2 + $0x58] sm:$0xff]
      %v516 = vld [vmem:[#allocation2 + $0x60] sm:$0xff]
      %v517 = vld [vmem:[#allocation2 + $0x68] sm:$0xff]
      %v518 = vld [vmem:[#allocation2 + $0x70] sm:$0xff]
      %v519 = vld [vmem:[#allocation2 + $0x78] sm:$0xff]
      %v520 = vld [vmem:[#allocation3] sm:$0xff]
      %v521 = vld [vmem:[#allocation3 + $0x8] sm:$0xff]
      %v522 = vld [vmem:[#allocation3 + $0x10] sm:$0xff]
      %v523 = vld [vmem:[#allocation3 + $0x18] sm:$0xff]
      %v524 = vld [vmem:[#allocation3 + $0x20] sm:$0xff]
      %v525 = vld [vmem:[#allocation3 + $0x28] sm:$0xff]
      %v526 = vld [vmem:[#allocation3 + $0x30] sm:$0xff]
      %v527 = vld [vmem:[#allocation3 + $0x38] sm:$0xff]
      %v528 = vld [vmem:[#allocation3 + $0x40] sm:$0xff]
      %v529 = vld [vmem:[#allocation3 + $0x48] sm:$0xff]
      %v530 = vld [vmem:[#allocation3 + $0x50] sm:$0xff]
      %v531 = vld [vmem:[#allocation3 + $0x58] sm:$0xff]
      %v532 = vld [vmem:[#allocation3 + $0x60] sm:$0xff]
      %v533 = vld [vmem:[#allocation3 + $0x68] sm:$0xff]
      %v534 = vld [vmem:[#allocation3 + $0x70] sm:$0xff]
      %v535 = vld [vmem:[#allocation3 + $0x78] sm:$0xff]
      %v536 = vlaneseq
      %v537 = vshrl.u32 %v536, 7
      %v538 = vadd.s32 %v537, 8
      %v539 = vadd.s32 %v537, 16
      %v540 = vadd.s32 %v537, 24
      %v541 = vadd.s32 %v537, 32
      %v542 = vadd.s32 %v537, 40
      %v543 = vadd.s32 %v537, 48
      %v544 = vadd.s32 %v537, 56
      %v545 = vadd.s32 %v537, 64
      %v546 = vadd.s32 %v537, 72
      %v547 = vadd.s32 %v537, 80
      %v548 = vadd.s32 %v537, 88
      %v549 = vadd.s32 %v537, 96
      %v550 = vadd.s32 %v537, 104
      %v551 = vadd.s32 %v537, 112
      %v552 = vadd.s32 %v537, 120
      %v553 = vlaneseq
      %v554 = vand.u32 %v553, 127
      %vm555 = vcmp.eq.s32.totalorder %v537, %v554
      %vm556 = vcmp.eq.s32.totalorder %v538, %v554
      %vm557 = vcmp.eq.s32.totalorder %v539, %v554
      %vm558 = vcmp.eq.s32.totalorder %v540, %v554
      %vm559 = vcmp.eq.s32.totalorder %v541, %v554
      %vm560 = vcmp.eq.s32.totalorder %v542, %v554
      %vm561 = vcmp.eq.s32.totalorder %v543, %v554
      %vm562 = vcmp.eq.s32.totalorder %v544, %v554
      %vm563 = vcmp.eq.s32.totalorder %v545, %v554
      %vm564 = vcmp.eq.s32.totalorder %v546, %v554
      %vm565 = vcmp.eq.s32.totalorder %v547, %v554
      %vm566 = vcmp.eq.s32.totalorder %v548, %v554
      %vm567 = vcmp.eq.s32.totalorder %v549, %v554
      %vm568 = vcmp.eq.s32.totalorder %v550, %v554
      %vm569 = vcmp.eq.s32.totalorder %v551, %v554
      %vm570 = vcmp.eq.s32.totalorder %v552, %v554
      %v571 = vsel %vm555, %v504, 0.0
      %v572 = vsel %vm556, %v505, 0.0
      %v573 = vsel %vm557, %v506, 0.0
      %v574 = vsel %vm558, %v507, 0.0
      %v575 = vsel %vm559, %v508, 0.0
      %v576 = vsel %vm560, %v509, 0.0
      %v577 = vsel %vm561, %v510, 0.0
      %v578 = vsel %vm562, %v511, 0.0
      %v579 = vsel %vm563, %v512, 0.0
      %v580 = vsel %vm564, %v513, 0.0
      %v581 = vsel %vm565, %v514, 0.0
      %v582 = vsel %vm566, %v515, 0.0
      %v583 = vsel %vm567, %v516, 0.0
      %v584 = vsel %vm568, %v517, 0.0
      %v585 = vsel %vm569, %v518, 0.0
      %v586 = vsel %vm570, %v519, 0.0
      %v587 = vadd.f32 %v571, %v572
      %v588 = vadd.f32 %v587, %v573
      %v589 = vadd.f32 %v588, %v574
      %v590 = vadd.f32 %v589, %v575
      %v591 = vadd.f32 %v590, %v576
      %v592 = vadd.f32 %v591, %v577
      %v593 = vadd.f32 %v592, %v578
      %v594 = vadd.f32 %v593, %v579
      %v595 = vadd.f32 %v594, %v580
      %v596 = vadd.f32 %v595, %v581
      %v597 = vadd.f32 %v596, %v582
      %v598 = vadd.f32 %v597, %v583
      %v599 = vadd.f32 %v598, %v584
      %v600 = vadd.f32 %v599, %v585
      %v601 = vadd.f32 %v600, %v586
      %v602 = vrot.slane %v601, 4
      %v603 = vadd.f32 %v601, %v602
      %v604 = vrot.slane %v603, 2
      %v605 = vadd.f32 %v603, %v604
      %v606 = vrot.slane %v605, 1
      %v607 = vadd.f32 %v605, %v606
      %v608 = vsel %vm555, %v520, 0.0
      %v609 = vsel %vm556, %v521, 0.0
      %v610 = vsel %vm557, %v522, 0.0
      %v611 = vsel %vm558, %v523, 0.0
      %v612 = vsel %vm559, %v524, 0.0
      %v613 = vsel %vm560, %v525, 0.0
      %v614 = vsel %vm561, %v526, 0.0
      %v615 = vsel %vm562, %v527, 0.0
      %v616 = vsel %vm563, %v528, 0.0
      %v617 = vsel %vm564, %v529, 0.0
      %v618 = vsel %vm565, %v530, 0.0
      %v619 = vsel %vm566, %v531, 0.0
      %v620 = vsel %vm567, %v532, 0.0
      %v621 = vsel %vm568, %v533, 0.0
      %v622 = vsel %vm569, %v534, 0.0
      %v623 = vsel %vm570, %v535, 0.0
      %v624 = vadd.f32 %v608, %v609
      %v625 = vadd.f32 %v624, %v610
      %v626 = vadd.f32 %v625, %v611
      %v627 = vadd.f32 %v626, %v612
      %v628 = vadd.f32 %v627, %v613
      %v629 = vadd.f32 %v628, %v614
      %v630 = vadd.f32 %v629, %v615
      %v631 = vadd.f32 %v630, %v616
      %v632 = vadd.f32 %v631, %v617
      %v633 = vadd.f32 %v632, %v618
      %v634 = vadd.f32 %v633, %v619
      %v635 = vadd.f32 %v634, %v620
      %v636 = vadd.f32 %v635, %v621
      %v637 = vadd.f32 %v636, %v622
      %v638 = vadd.f32 %v637, %v623
      %v639 = vrot.slane %v638, 4
      %v640 = vadd.f32 %v638, %v639
      %v641 = vrot.slane %v640, 2
      %v642 = vadd.f32 %v640, %v641
      %v643 = vrot.slane %v642, 1
      %v644 = vadd.f32 %v642, %v643
      %v645 = vmul.f32 %v501, 8.0
      %v646 = vmul.f32 %v645, %v501
      %v647 = vsub.f32 %v607, %v646
      %v648 = vmul.f32 %v503, 8.0
      %v649 = vmul.f32 %v648, %v503
      %v650 = vsub.f32 %v644, %v649
      %vm651 = vcmp.lt.s32.totalorder %v554, 32
      %v652 = vmul.f32 %v647, 0.14285715
      %v653 = vadd.f32 %v652, 0.0001
      %v654 = vrsqrt.pop %v653
      %v655 = vmul.f32 %v654, %v653
      %v656 = vmul.f32 %v655, %v654
      %v657 = vmul.f32 0.5, %v656
      %v658 = vsub.f32 1.5, %v657
      %v659 = vmul.f32 %v654, %v658
      %v660 = vmul.f32 %v653, %v659
      %vm661 = vcmp.eq.f32.partialorder %v653, inf
      %v662 = vsel %vm661, %v653, %v660
      %vm663 = vcmp.eq.f32.partialorder %v653, 0.0
      %v664 = vand.u32 %v653, 2147483648
      %v665 = vsel %vm663, %v664, %v662
      %v666 = vmul.f32 %v650, 0.14285715
      %v667 = vadd.f32 %v666, 0.0001
      %v668 = vrsqrt.pop %v667
      %v669 = vmul.f32 %v668, %v667
      %v670 = vmul.f32 %v669, %v668
      %v671 = vmul.f32 0.5, %v670
      %v672 = vsub.f32 1.5, %v671
      %v673 = vmul.f32 %v668, %v672
      %v674 = vmul.f32 %v667, %v673
      %vm675 = vcmp.eq.f32.partialorder %v667, inf
      %v676 = vsel %vm675, %v667, %v674
      %vm677 = vcmp.eq.f32.partialorder %v667, 0.0
      %v678 = vand.u32 %v667, 2147483648
      %v679 = vsel %vm677, %v678, %v676
      %v680 = vsub.f32 1.0, %v665
      %v681 = vmax.f32 %v680, 0.0
      %v682 = vsel %vm651, %v681, 0.0
      %vm683 = vcmask 1040384
      %v684 = vsel %vm683, %v682, 0.0
      %685 = vadd.xlane.f32.xlu0 %v684
      %v686 = vpop.xlane.xlu0 %685
      %v687 = vrot.slane %v686, 4
      %v688 = vadd.f32 %v686, %v687
      %v689 = vrot.slane %v688, 2
      %v690 = vadd.f32 %v688, %v689
      %v691 = vrot.slane %v690, 1
      %v692 = vadd.f32 %v690, %v691
      %s693 = vtos %v692
      %v694 = vsub.f32 1.0, %v679
      %v695 = vmax.f32 %v694, 0.0
      %v696 = vsel %vm651, %v695, 0.0
      %v697 = vsel %vm683, %v696, 0.0
      %698 = vadd.xlane.f32.xlu0 %v697
      %v699 = vpop.xlane.xlu0 %698
      %v700 = vrot.slane %v699, 4
      %v701 = vadd.f32 %v699, %v700
      %v702 = vrot.slane %v701, 2
      %v703 = vadd.f32 %v701, %v702
      %v704 = vrot.slane %v703, 1
      %v705 = vadd.f32 %v703, %v704
      %s706 = vtos %v705
      %s707 = sadd.f32 %s693, %s706
      %v708 = vrcp.pop 64.0
      %v709 = vmul.f32 64.0, %v708
      %v710 = vsub.f32 1.0, %v709
      %v711 = vmul.f32 %v708, %v710
      %v712 = vadd.f32 %v708, %v711
      %vm713 = vweird.f32 %v708
      %v714 = vsel %vm713, %v708, %v712
      %s715 = vtos %v714
      %s716 = smul.f32 %s707, %s715
      %717 = vmatpush.msra.mxu0 %v519
      %718 = vmatpush.msra.mxu0 %v518
      %719 = vmatpush.msra.mxu0 %v517
      %720 = vmatpush.msra.mxu0 %v516
      %721 = vmatpush.msra.mxu0 %v515
      %722 = vmatpush.msra.mxu0 %v514
      %723 = vmatpush.msra.mxu0 %v513
      %724 = vmatpush.msra.mxu0 %v512
      %725 = vmatpush.msra.mxu0 %v511
      %726 = vmatpush.msra.mxu0 %v510
      %727 = vmatpush.msra.mxu0 %v509
      %728 = vmatpush.msra.mxu0 %v508
      %729 = vmatpush.msra.mxu0 %v507
      %730 = vmatpush.msra.mxu0 %v506
      %731 = vmatpush.msra.mxu0 %v505
      %732 = vmatpush.msra.mxu0 %v504
      %733 = vmatmul.f32.gmra.mxu0 %v501
      %v734 = vpop.f32.mrf.mxu0
      %v735 = vadd.f32 0.0, %v734
      %736 = vdwg.mxu0
      %737 = vmatpush.msra.mxu0 %v535
      %738 = vmatpush.msra.mxu0 %v534
      %739 = vmatpush.msra.mxu0 %v533
      %740 = vmatpush.msra.mxu0 %v532
      %741 = vmatpush.msra.mxu0 %v531
      %742 = vmatpush.msra.mxu0 %v530
      %743 = vmatpush.msra.mxu0 %v529
      %744 = vmatpush.msra.mxu0 %v528
      %745 = vmatpush.msra.mxu0 %v527
      %746 = vmatpush.msra.mxu0 %v526
      %747 = vmatpush.msra.mxu0 %v525
      %748 = vmatpush.msra.mxu0 %v524
      %749 = vmatpush.msra.mxu0 %v523
      %750 = vmatpush.msra.mxu0 %v522
      %751 = vmatpush.msra.mxu0 %v521
      %752 = vmatpush.msra.mxu0 %v520
      %753 = vmatmul.f32.gmra.mxu0 %v503
      %v754 = vpop.f32.mrf.mxu0
      %v755 = vadd.f32 0.0, %v754
      %756 = vdwg.mxu0
      %v757 = vmul.f32 %v735, %v501
      %v758 = vsel %vm683, %v757, 0.0
      %759 = vadd.xlane.f32.xlu0 %v758
      %v760 = vpop.xlane.xlu0 %759
      %v761 = vrot.slane %v760, 4
      %v762 = vadd.f32 %v760, %v761
      %v763 = vrot.slane %v762, 2
      %v764 = vadd.f32 %v762, %v763
      %v765 = vrot.slane %v764, 1
      %v766 = vadd.f32 %v764, %v765
      %s767 = vtos %v766
      %v768 = vmul.f32 %v755, %v503
      %v769 = vsel %vm683, %v768, 0.0
      %770 = vadd.xlane.f32.xlu0 %v769
      %v771 = vpop.xlane.xlu0 %770
      %v772 = vrot.slane %v771, 4
      %v773 = vadd.f32 %v771, %v772
      %v774 = vrot.slane %v773, 2
      %v775 = vadd.f32 %v773, %v774
      %v776 = vrot.slane %v775, 1
      %v777 = vadd.f32 %v775, %v776
      %s778 = vtos %v777
      %v779 = vmul.f32 %v501, %v501
      %v780 = vsel %vm683, %v779, 0.0
      %781 = vadd.xlane.f32.xlu0 %v780
      %v782 = vpop.xlane.xlu0 %781
      %v783 = vrot.slane %v782, 4
      %v784 = vadd.f32 %v782, %v783
      %v785 = vrot.slane %v784, 2
      %v786 = vadd.f32 %v784, %v785
      %v787 = vrot.slane %v786, 1
      %v788 = vadd.f32 %v786, %v787
      %s789 = vtos %v788
      %v790 = vmul.f32 %v503, %v503
      %v791 = vsel %vm683, %v790, 0.0
      %792 = vadd.xlane.f32.xlu0 %v791
      %v793 = vpop.xlane.xlu0 %792
      %v794 = vrot.slane %v793, 4
      %v795 = vadd.f32 %v793, %v794
      %v796 = vrot.slane %v795, 2
      %v797 = vadd.f32 %v795, %v796
      %v798 = vrot.slane %v797, 1
      %v799 = vadd.f32 %v797, %v798
      %s800 = vtos %v799
      %v801 = vmul.f32 %v504, %v504
      %v802 = vmul.f32 %v505, %v505
      %v803 = vmul.f32 %v506, %v506
      %v804 = vmul.f32 %v507, %v507
      %v805 = vmul.f32 %v508, %v508
      %v806 = vmul.f32 %v509, %v509
      %v807 = vmul.f32 %v510, %v510
      %v808 = vmul.f32 %v511, %v511
      %v809 = vmul.f32 %v512, %v512
      %v810 = vmul.f32 %v513, %v513
      %v811 = vmul.f32 %v514, %v514
      %v812 = vmul.f32 %v515, %v515
      %v813 = vmul.f32 %v516, %v516
      %v814 = vmul.f32 %v517, %v517
      %v815 = vmul.f32 %v518, %v518
      %v816 = vmul.f32 %v519, %v519
      %v817 = vadd.f32 %v801, %v802
      %v818 = vadd.f32 %v817, %v803
      %v819 = vadd.f32 %v818, %v804
      %v820 = vadd.f32 %v819, %v805
      %v821 = vadd.f32 %v820, %v806
      %v822 = vadd.f32 %v821, %v807
      %v823 = vadd.f32 %v822, %v808
      %v824 = vadd.f32 %v823, %v809
      %v825 = vadd.f32 %v824, %v810
      %v826 = vadd.f32 %v825, %v811
      %v827 = vadd.f32 %v826, %v812
      %v828 = vadd.f32 %v827, %v813
      %v829 = vadd.f32 %v828, %v814
      %v830 = vadd.f32 %v829, %v815
      %v831 = vadd.f32 %v830, %v816
      %832 = vadd.xlane.f32.xlu0 %v831
      %v833 = vpop.xlane.xlu0 %832
      %v834 = vrot.slane %v833, 4
      %v835 = vadd.f32 %v833, %v834
      %v836 = vrot.slane %v835, 2
      %v837 = vadd.f32 %v835, %v836
      %v838 = vrot.slane %v837, 1
      %v839 = vadd.f32 %v837, %v838
      %s840 = vtos %v839
      %v841 = vmul.f32 %v520, %v520
      %v842 = vmul.f32 %v521, %v521
      %v843 = vmul.f32 %v522, %v522
      %v844 = vmul.f32 %v523, %v523
      %v845 = vmul.f32 %v524, %v524
      %v846 = vmul.f32 %v525, %v525
      %v847 = vmul.f32 %v526, %v526
      %v848 = vmul.f32 %v527, %v527
      %v849 = vmul.f32 %v528, %v528
      %v850 = vmul.f32 %v529, %v529
      %v851 = vmul.f32 %v530, %v530
      %v852 = vmul.f32 %v531, %v531
      %v853 = vmul.f32 %v532, %v532
      %v854 = vmul.f32 %v533, %v533
      %v855 = vmul.f32 %v534, %v534
      %v856 = vmul.f32 %v535, %v535
      %v857 = vadd.f32 %v841, %v842
      %v858 = vadd.f32 %v857, %v843
      %v859 = vadd.f32 %v858, %v844
      %v860 = vadd.f32 %v859, %v845
      %v861 = vadd.f32 %v860, %v846
      %v862 = vadd.f32 %v861, %v847
      %v863 = vadd.f32 %v862, %v848
      %v864 = vadd.f32 %v863, %v849
      %v865 = vadd.f32 %v864, %v850
      %v866 = vadd.f32 %v865, %v851
      %v867 = vadd.f32 %v866, %v852
      %v868 = vadd.f32 %v867, %v853
      %v869 = vadd.f32 %v868, %v854
      %v870 = vadd.f32 %v869, %v855
      %v871 = vadd.f32 %v870, %v856
      %872 = vadd.xlane.f32.xlu0 %v871
      %v873 = vpop.xlane.xlu0 %872
      %v874 = vrot.slane %v873, 4
      %v875 = vadd.f32 %v873, %v874
      %v876 = vrot.slane %v875, 2
      %v877 = vadd.f32 %v875, %v876
      %v878 = vrot.slane %v877, 1
      %v879 = vadd.f32 %v877, %v878
      %s880 = vtos %v879
      %s881 = smul.f32 %s767, 16.0
      %s882 = ssub.f32 %s840, %s881
      %s883 = smul.f32 %s789, 64.0
      %s884 = smul.f32 %s883, %s789
      %s885 = sadd.f32 %s882, %s884
      %s886 = smul.f32 %s778, 16.0
      %s887 = ssub.f32 %s880, %s886
      %s888 = smul.f32 %s800, 64.0
      %s889 = smul.f32 %s888, %s800
      %s890 = sadd.f32 %s887, %s889
      %v891 = vmul.f32 %v647, %v647
      %v892 = vsel %vm683, %v891, 0.0
      %893 = vadd.xlane.f32.xlu0 %v892
      %v894 = vpop.xlane.xlu0 %893
      %v895 = vrot.slane %v894, 4
      %v896 = vadd.f32 %v894, %v895
      %v897 = vrot.slane %v896, 2
      %v898 = vadd.f32 %v896, %v897
      %v899 = vrot.slane %v898, 1
      %v900 = vadd.f32 %v898, %v899
      %s901 = vtos %v900
      %s902 = ssub.f32 %s885, %s901
      %v903 = vmul.f32 %v650, %v650
      %v904 = vsel %vm683, %v903, 0.0
      %905 = vadd.xlane.f32.xlu0 %v904
      %v906 = vpop.xlane.xlu0 %905
      %v907 = vrot.slane %v906, 4
      %v908 = vadd.f32 %v906, %v907
      %v909 = vrot.slane %v908, 2
      %v910 = vadd.f32 %v908, %v909
      %v911 = vrot.slane %v910, 1
      %v912 = vadd.f32 %v910, %v911
      %s913 = vtos %v912
      %s914 = ssub.f32 %s890, %s913
      %s915 = sadd.f32 %s902, %s914
      %s916 = smul.f32 %s915, 0.020408163
      %v917 = vrcp.pop 32.0
      %v918 = vmul.f32 32.0, %v917
      %v919 = vsub.f32 1.0, %v918
      %v920 = vmul.f32 %v917, %v919
      %v921 = vadd.f32 %v917, %v920
      %vm922 = vweird.f32 %v917
      %v923 = vsel %vm922, %v917, %v921
      %s924 = vtos %v923
      %s925 = smul.f32 %s916, %s924
      %v926 = vld [vmem:[#allocation6] sm:$0x1]
      %v927 = vsel %vm683, %v926, 0.0
      %928 = vadd.xlane.f32.xlu0 %v927
      %v929 = vpop.xlane.xlu0 %928
      %v930 = vrot.slane %v929, 4
      %v931 = vadd.f32 %v929, %v930
      %v932 = vrot.slane %v931, 2
      %v933 = vadd.f32 %v931, %v932
      %v934 = vrot.slane %v933, 1
      %v935 = vadd.f32 %v933, %v934
      %s936 = vtos %v935
      %v937 = vrcp.pop 256.0
      %v938 = vmul.f32 256.0, %v937
      %v939 = vsub.f32 1.0, %v938
      %v940 = vmul.f32 %v937, %v939
      %v941 = vadd.f32 %v937, %v940
      %vm942 = vweird.f32 %v937
      %v943 = vsel %vm942, %v937, %v941
      %s944 = vtos %v943
      %s945 = smul.f32 %s936, %s944
      %s946 = smul.f32 %s945, 25.0
      %s947 = smul.f32 %s716, 25.0
      %s948 = sadd.f32 %s946, %s947
      %s949 = sadd.f32 %s948, %s925
      %s950 = scalar_lea.smem [#allocation12], 0
      %951 = sst [smem:[%s950]] %s949
    $region25: #{tpu_custom_call.1} parent=1 // pred_fallthru
      _
    // Predicated region
    $region26: #{tpu_custom_call.1} parent=1 // pred_check
      _
    $region27: #{tpu_custom_call.1} parent=1 // pred_check_branch
      %953 = sbr.rel (0) target = $region29
    $region28: #{tpu_custom_call.1} parent=1 // pred_region
      %955 = vsyncadd [#allocation9], 0
      %s957 = sshll.u32 %s2, 4
      %s958 = int_to_ptr.hbm [resolvable:$true] %s957
      %960 = dma.smem_to_hbm [#allocation12], 16, %s958, [#allocation9]
    $region29: #{tpu_custom_call.1} parent=1 // pred_fallthru
      _
    // Predicated region
    $region30: #{tpu_custom_call.1} parent=1 // pred_check
      _
    $region31: #{tpu_custom_call.1} parent=1 // pred_check_branch
      %962 = sbr.rel (0) target = $region33
    $region32: #{tpu_custom_call.1} parent=1 // pred_region
      %964 = dma.done [#allocation9], 16
    $region33: #{tpu_custom_call.1} parent=1 // pred_fallthru
      _
    %965 = sfence
    %966 = vsyncpa [#allocation8], 1
    %967 = vsyncpa [#allocation11], 1
    %968 = vsyncpa [#allocation9], 1

</llo_original>
